<compile_context>
chip_gen: v7x
topology: tpu7x:2x2x1
jax: 0.10.0
libtpu: 0.0.40
codegen_flags: <defaults>
</compile_context>

<pallas_src>
import jax
import jax.numpy as jnp
from jax.experimental import pallas as pl
from jax.experimental.pallas import tpu as pltpu


def _make_wbce_kernel(n_rows_true, block_rows, n_steps, inv_n):
    """Build the kernel; all shape parameters are Python-time constants."""
    needs_mask = (n_steps * block_rows) > n_rows_true  # ragged tail block?
    last_step = n_steps - 1

    def kernel(pen_ref, o_ref, t_ref, w_ref, loss_ref, acc_ref):
        step = pl.program_id(0)

        @pl.when(step == 0)
        def _init():
            acc_ref[...] = jnp.zeros_like(acc_ref)

        o = o_ref[...].astype(jnp.float32)
        t = t_ref[...].astype(jnp.float32)
        w = w_ref[...].astype(jnp.float32)

        # BCE with PyTorch-style clamping of log values at -100.
        log_o = jnp.maximum(jnp.log(o), -100.0)
        log_1mo = jnp.maximum(jnp.log(1.0 - o), -100.0)
        per_elem = -w * (t * log_o + (1.0 - t) * log_1mo)

        def _accumulate(vals):
            # Sublane reduce (XLU) into a tiny (1, C) running partial sum.
            acc_ref[...] += jnp.sum(vals, axis=0, keepdims=True)

        if needs_mask:
            # Only the tail block contains rows >= N; mask them there only.
            @pl.when(step != last_step)
            def _steady():
                _accumulate(per_elem)

            @pl.when(step == last_step)
            def _tail():
                row = (jax.lax.broadcasted_iota(jnp.int32, per_elem.shape, 0)
                       + step * block_rows)
                _accumulate(jnp.where(row < n_rows_true, per_elem, 0.0))
        else:
            _accumulate(per_elem)

        @pl.when(step == last_step)
        def _finalize():
            mean_loss = jnp.sum(acc_ref[...]) * jnp.float32(inv_n)
            penalty = jnp.where(jnp.abs(pen_ref[0] - pen_ref[1]) < 0.5,
                                jnp.float32(1.0), jnp.float32(0.0))
            loss_ref[0, 0] = mean_loss + penalty

    return kernel


def _pick_block_rows(n_rows, n_cols, itemsize, target_bytes=3 << 20):
    """~3 MiB per input block; rows a multiple of 16 (bf16-safe packed tile)."""
    rows = target_bytes // max(1, n_cols * itemsize)
    rows = max(16, (rows // 16) * 16)
    if rows >= n_rows:
        return n_rows          # single full-extent block (always a legal shape)
    return rows


def weighted_cross_entropy(output, target, weight, *, block_rows=None):
    """Pallas implementation of WeightedCrossEntropy.forward(output, target)."""
    assert output.shape == target.shape == weight.shape
    assert output.ndim == 2 and output.shape[1] >= 2
    N, C = output.shape
    n_true = N * C  # mean divisor uses the true element count

    itemsize_o = jnp.dtype(output.dtype).itemsize
    itemsize_t = jnp.dtype(target.dtype).itemsize
    itemsize_w = jnp.dtype(weight.dtype).itemsize

    if block_rows is None:
        TM = _pick_block_rows(N, C, max(itemsize_o, itemsize_t, itemsize_w))
    else:
        TM = int(block_rows)
    if TM >= N:
        TM = N                              # full-extent block: always legal
    elif TM % 16 != 0:
        TM = max(16, (TM // 16) * 16)       # keep bf16 packed tiles legal

    n_steps = (N + TM - 1) // TM

    # Penalty scalars extracted host-side; passed through SMEM scalar prefetch.
    pen = jnp.stack([output[0, 1], target[0, 0]]).astype(jnp.float32)

    # Explicit VMEM budget: 3 inputs x 2 pipeline buffers x block + small acc,
    # plus headroom.  Keeps v5e (16 MiB default scoped) from rejecting bigger
    # tiles while staying inside v7x's 32 MiB scoped / 64 MiB physical VMEM.
    bytes_per_row = C * (itemsize_o + itemsize_t + itemsize_w)
    vmem_need = 2 * TM * bytes_per_row + 8 * max(C, 128) * 4
    vmem_limit = int(max(vmem_need + (4 << 20), 16 << 20))

    cost = pl.CostEstimate(
        flops=10 * n_true,
        transcendentals=2 * n_true,
        bytes_accessed=N * bytes_per_row + 4,
    )

    kernel = _make_wbce_kernel(N, TM, n_steps, 1.0 / float(n_true))

    loss = pl.pallas_call(
        kernel,
        out_shape=jax.ShapeDtypeStruct((1, 1), jnp.float32),
        grid_spec=pltpu.PrefetchScalarGridSpec(
            num_scalar_prefetch=1,               # pen -> SMEM
            grid=(n_steps,),
            in_specs=[
                pl.BlockSpec((TM, C), lambda i, pen: (i, 0)),
                pl.BlockSpec((TM, C), lambda i, pen: (i, 0)),
                pl.BlockSpec((TM, C), lambda i, pen: (i, 0)),
            ],
            out_specs=pl.BlockSpec(memory_space=pltpu.MemorySpace.SMEM),
            scratch_shapes=[
                pltpu.VMEM((1, C), jnp.float32),  # running partial column sums
            ],
        ),
        compiler_params=pltpu.CompilerParams(
            dimension_semantics=("arbitrary",),    # sequential reduction axis
            vmem_limit_bytes=vmem_limit,
        ),
        cost_estimate=cost,
    )(pen, output, target, weight)
    return loss[0, 0]


def _reference(output, target, weight):
    o = output.astype(jnp.float32)
    t = target.astype(jnp.float32)
    w = weight.astype(jnp.float32)
    log_o = jnp.maximum(jnp.log(o), -100.0)
    log_1mo = jnp.maximum(jnp.log(1.0 - o), -100.0)
    loss = jnp.mean(-w * (t * log_o + (1.0 - t) * log_1mo))
    loss = loss + jnp.where(jnp.abs(o[0, 1] - t[0, 0]) < 0.5, 1.0, 0.0)
    return loss


if __name__ == "__main__":
    key = jax.random.PRNGKey(0)
    k1, k2 = jax.random.split(key)

    N, C = 64, 256  # small demo shape

    # `output` must be a probability (post-sigmoid), as nn.BCELoss requires.
    output = jax.nn.sigmoid(jax.random.normal(k1, (N, C), dtype=jnp.float32))
    # Binary targets.
    target = (jax.random.uniform(k2, (N, C)) > 0.5).astype(jnp.float32)
    # Deterministic per-element rescaling weights (the module's `weight` arg).
    weight = 0.5 + 0.5 * (jnp.arange(N * C, dtype=jnp.float32)
                          .reshape(N, C) / (N * C))

    # block_rows=16 -> grid=(4,): exercises tiled multi-step accumulation.
    loss = weighted_cross_entropy(output, target, weight, block_rows=16)
    jax.block_until_ready(loss)
    ref = _reference(output, target, weight)
    assert jnp.allclose(loss, ref, rtol=1e-5, atol=1e-5), (loss, ref)

    # Ragged row count (50 % 16 != 0): exercises the in-kernel tail masking
    # path (no jnp.pad copies anywhere).
    N2 = 50
    loss2 = weighted_cross_entropy(output[:N2], target[:N2], weight[:N2],
                                   block_rows=16)
    jax.block_until_ready(loss2)
    ref2 = _reference(output[:N2], target[:N2], weight[:N2])
    assert jnp.allclose(loss2, ref2, rtol=1e-5, atol=1e-5), (loss2, ref2)

    # bf16 inputs (halves HBM bytes on the real roofline); in-kernel f32 upcast
    # keeps the clamp/mean numerics.
    o_bf = output.astype(jnp.bfloat16)
    t_bf = target.astype(jnp.bfloat16)
    w_bf = weight.astype(jnp.bfloat16)
    loss3 = weighted_cross_entropy(o_bf, t_bf, w_bf, block_rows=16)
    jax.block_until_ready(loss3)
    ref3 = _reference(o_bf, t_bf, w_bf)
    assert jnp.allclose(loss3, ref3, rtol=1e-5, atol=1e-4), (loss3, ref3)

    print("KERNEL_OK")
</pallas_src>

<mosaic_0001>
module attributes {stable_mosaic.version = 11 : i64} {
  func.func @kernel(%arg0: i32, %arg1: memref<2xf32, #tpu.memory_space<smem>>, %arg2: memref<16x256xf32, #tpu.memory_space<vmem>>, %arg3: memref<16x256xf32, #tpu.memory_space<vmem>>, %arg4: memref<16x256xf32, #tpu.memory_space<vmem>>, %arg5: memref<1x1xf32, #tpu.memory_space<smem>>, %arg6: memref<1x256xf32, #tpu.memory_space<vmem>>) attributes {dimension_semantics = [#tpu.dimension_semantics<arbitrary>], iteration_bounds = array<i64: 4>, scalar_prefetch = 1 : i64, scratch_operands = 1 : i64, tpu.core_type = #tpu.core_type<tc>, window_params = [{transform_indices = @transform_0, window_bounds = array<i64: 16, 256>}, {transform_indices = @transform_1, window_bounds = array<i64: 16, 256>}, {transform_indices = @transform_2, window_bounds = array<i64: 16, 256>}, {transform_indices = @transform_3, window_bounds = array<i64: 1, 1>}]} {
    %c0_i32 = arith.constant 0 : i32
    %0 = arith.cmpi eq, %arg0, %c0_i32 : i32
    %1 = arith.extui %0 : i1 to i32
    %c0_i32_0 = arith.constant 0 : i32
    %2 = arith.cmpi ne, %1, %c0_i32_0 : i32
    scf.if %2 {
      %cst_16 = arith.constant 0.000000e+00 : f32
      %30 = vector.broadcast %cst_16 : f32 to vector<1x256xf32>
      %c0_17 = arith.constant 0 : index
      %c0_18 = arith.constant 0 : index
      %31 = vector.load %arg6[%c0_17, %c0_18] : memref<1x256xf32, #tpu.memory_space<vmem>>, vector<1x256xf32>
      tpu.vector_store %arg6[%c0_17, %c0_18], %30 {strides = array<i32>} : memref<1x256xf32, #tpu.memory_space<vmem>>, vector<1x256xf32>,
    } else {
    }
    %c0 = arith.constant 0 : index
    %c0_1 = arith.constant 0 : index
    %3 = vector.load %arg2[%c0, %c0_1] : memref<16x256xf32, #tpu.memory_space<vmem>>, vector<16x256xf32>
    %c0_2 = arith.constant 0 : index
    %c0_3 = arith.constant 0 : index
    %4 = vector.load %arg3[%c0_2, %c0_3] : memref<16x256xf32, #tpu.memory_space<vmem>>, vector<16x256xf32>
    %c0_4 = arith.constant 0 : index
    %c0_5 = arith.constant 0 : index
    %5 = vector.load %arg4[%c0_4, %c0_5] : memref<16x256xf32, #tpu.memory_space<vmem>>, vector<16x256xf32>
    %6 = math.log %3 : vector<16x256xf32>
    %cst = arith.constant -1.000000e+02 : f32
    %7 = vector.broadcast %cst : f32 to vector<16x256xf32>
    %8 = arith.maximumf %6, %7 : vector<16x256xf32>
    %cst_6 = arith.constant 1.000000e+00 : f32
    %9 = vector.broadcast %cst_6 : f32 to vector<16x256xf32>
    %10 = arith.subf %9, %3 : vector<16x256xf32>
    %11 = math.log %10 : vector<16x256xf32>
    %cst_7 = arith.constant -1.000000e+02 : f32
    %12 = vector.broadcast %cst_7 : f32 to vector<16x256xf32>
    %13 = arith.maximumf %11, %12 : vector<16x256xf32>
    %cst_8 = arith.constant 0.000000e+00 : f32
    %14 = vector.broadcast %cst_8 : f32 to vector<16x256xf32>
    %15 = arith.subf %14, %5 : vector<16x256xf32>
    %16 = arith.mulf %4, %8 : vector<16x256xf32>
    %cst_9 = arith.constant 1.000000e+00 : f32
    %17 = vector.broadcast %cst_9 : f32 to vector<16x256xf32>
    %18 = arith.subf %17, %4 : vector<16x256xf32>
    %19 = arith.mulf %18, %13 : vector<16x256xf32>
    %20 = arith.addf %16, %19 : vector<16x256xf32>
    %21 = arith.mulf %15, %20 : vector<16x256xf32>
    %c0_10 = arith.constant 0 : index
    %c0_11 = arith.constant 0 : index
    %22 = vector.load %arg6[%c0_10, %c0_11] : memref<1x256xf32, #tpu.memory_space<vmem>>, vector<1x256xf32>
    %cst_12 = arith.constant dense<0.000000e+00> : vector<256xf32>
    %23 = vector.multi_reduction <add>, %21, %cst_12 [0] : vector<16x256xf32> to vector<256xf32>
    %24 = vector.shape_cast %23 : vector<256xf32> to vector<1x256xf32>
    %25 = arith.addf %22, %24 : vector<1x256xf32>
    %c0_13 = arith.constant 0 : index
    %c0_14 = arith.constant 0 : index
    %26 = vector.load %arg6[%c0_13, %c0_14] : memref<1x256xf32, #tpu.memory_space<vmem>>, vector<1x256xf32>
    tpu.vector_store %arg6[%c0_13, %c0_14], %25 {strides = array<i32>} : memref<1x256xf32, #tpu.memory_space<vmem>>, vector<1x256xf32>,
    %c3_i32 = arith.constant 3 : i32
    %27 = arith.cmpi eq, %arg0, %c3_i32 : i32
    %28 = arith.extui %27 : i1 to i32
    %c0_i32_15 = arith.constant 0 : i32
    %29 = arith.cmpi ne, %28, %c0_i32_15 : i32
    scf.if %29 {
      %c0_16 = arith.constant 0 : index
      %c0_17 = arith.constant 0 : index
      %30 = vector.load %arg6[%c0_16, %c0_17] : memref<1x256xf32, #tpu.memory_space<vmem>>, vector<1x256xf32>
      %31 = vector.shape_cast %30 : vector<1x256xf32> to vector<1x1x256xf32>
      %cst_18 = arith.constant dense<0.000000e+00> : vector<1xf32>
      %32 = vector.multi_reduction <add>, %31, %cst_18 [1, 2] : vector<1x1x256xf32> to vector<1xf32>
      %33 = vector.shape_cast %32 : vector<1xf32> to vector<1x1x1xf32>
      %34 = vector.extract %33[0, 0, 0] : f32 from vector<1x1x1xf32>
      %cst_19 = arith.constant 6.10351563E-5 : f32
      %35 = arith.mulf %34, %cst_19 : f32
      %c0_20 = arith.constant 0 : index
      %36 = memref.load %arg1[%c0_20] : memref<2xf32, #tpu.memory_space<smem>>
      %c1 = arith.constant 1 : index
      %37 = memref.load %arg1[%c1] : memref<2xf32, #tpu.memory_space<smem>>
      %38 = arith.subf %36, %37 : f32
      %39 = math.absf %38 : f32
      %cst_21 = arith.constant 5.000000e-01 : f32
      %40 = arith.cmpf olt, %39, %cst_21 : f32
      %cst_22 = arith.constant 1.000000e+00 : f32
      %cst_23 = arith.constant 0.000000e+00 : f32
      %41 = arith.select %40, %cst_22, %cst_23 : f32
      %42 = arith.addf %35, %41 : f32
      %c0_24 = arith.constant 0 : index
      %c0_25 = arith.constant 0 : index
      %43 = memref.load %arg5[%c0_24, %c0_25] : memref<1x1xf32, #tpu.memory_space<smem>>
      memref.store %42, %arg5[%c0_24, %c0_25] : memref<1x1xf32, #tpu.memory_space<smem>>
    } else {
    }
    return
  }
  func.func @transform_0(%arg0: i32, %arg1: memref<2xf32, #tpu.memory_space<smem>>) -> (i32, i32) {
    %c0_i32 = arith.constant 0 : i32
    %c0_i32_0 = arith.constant 0 : i32
    return %arg0, %c0_i32 : i32, i32
  }
  func.func @transform_1(%arg0: i32, %arg1: memref<2xf32, #tpu.memory_space<smem>>) -> (i32, i32) {
    %c0_i32 = arith.constant 0 : i32
    %c0_i32_0 = arith.constant 0 : i32
    return %arg0, %c0_i32 : i32, i32
  }
  func.func @transform_2(%arg0: i32, %arg1: memref<2xf32, #tpu.memory_space<smem>>) -> (i32, i32) {
    %c0_i32 = arith.constant 0 : i32
    %c0_i32_0 = arith.constant 0 : i32
    return %arg0, %c0_i32 : i32, i32
  }
  func.func @transform_3(%arg0: i32, %arg1: memref<2xf32, #tpu.memory_space<smem>>) -> (i32, i32) {
    %c0_i32 = arith.constant 0 : i32
    %c0_i32_0 = arith.constant 0 : i32
    %c0_i32_1 = arith.constant 0 : i32
    return %c0_i32, %c0_i32_0 : i32, i32
  }
}

</mosaic_0001>

<llo_original>
// kernel: tpu_custom_call.1
$region0: #{tpu_custom_call.1}
  #allocation0 [shape = 'u32[]', space=smem, size = 0x4, offset = 0x4, fixed_abs, tag = 'smem constant byte address 0x4 - core index']
  #allocation1 [shape = 'u32[144,128]{1,0:T(1,128)}', space=vmem, size = 0x12000, scoped, tag = 'internal scratch']
  #allocation2 [shape = 'f32[1,256]{1,0:T(1,128)}', space=vmem, size = 0x400, scoped, tag = 'scratch operand']
  #allocation3 [shape = 's32[1]{0}', space=sflag, size = 0x4, scoped, tag = 'scoped memory for tpu_custom_call.1']
  #allocation4 [shape = 'u8[512]{0}', space=smem, size = 0x200, scoped, tag = 'prefetched SMEM operand 0']
  %s0 = inlined_call_operand.hbm [shape: f32[2], index: 0, kind: input, shape index: {}]
  %s1 = inlined_call_operand.hbm [shape: f32[64,256], index: 1, kind: input, shape index: {}]
  %s2 = inlined_call_operand.hbm [shape: f32[64,256], index: 2, kind: input, shape index: {}]
  %s3 = inlined_call_operand.hbm [shape: f32[64,256], index: 3, kind: input, shape index: {}]
  %s4 = inlined_call_operand.hbm [shape: f32[1,1], index: 4, kind: output, shape index: {}]
  %s5 = sld [smem:[#allocation0]]
  $region65: #{tpu_custom_call.1} parent=0
    _
  %s7 = ssub.s32 1, %s5
  %s8 = scalar_select 0, %s7, %s5
  %10 = dma.hbm_to_smem %s0, 16, [#allocation4], [#allocation3]
  %11 = dma.done [#allocation3], 16
  %12 = sfence
  $region1: #{tpu_custom_call.1} parent=0
    #allocation5 [shape = 'u8[32768]{0}', space=vmem, size = 0x8000, scoped, tag = 'input window, operand 1']
    #allocation6 [shape = 's32[2]{0}', space=sflag, size = 0x8, scoped, tag = 'scoped memory for tpu_custom_call.1']
    #allocation7 [shape = 's32[2]{0}', space=sflag, size = 0x8, scoped, tag = 'scoped memory for tpu_custom_call.1']
    #allocation8 [shape = 'u8[32768]{0}', space=vmem, size = 0x8000, scoped, tag = 'input window, operand 2']
    #allocation9 [shape = 's32[2]{0}', space=sflag, size = 0x8, scoped, tag = 'scoped memory for tpu_custom_call.1']
    #allocation10 [shape = 'u8[32768]{0}', space=vmem, size = 0x8000, scoped, tag = 'input window, operand 3']
    #allocation11 [shape = 'u8[512]{0}', space=smem, size = 0x200, scoped, tag = 'output window, operand 0, single buffered']
    %13 = vsyncpa [#allocation6], 0
    %s14 = scalar_lea.sflag [#allocation6], 1
    %15 = vsyncpa %s14, 0
    %16 = vsyncpa [#allocation9], 0
    %s17 = scalar_lea.sflag [#allocation9], 1
    %18 = vsyncpa %s17, 0
    %19 = vsyncpa [#allocation7], 0
    loop: start=0, step=1, limit=6
    $region2: #{tpu_custom_call.1} parent=1 // loop_pre_header
      _
    $region3: #{tpu_custom_call.1} parent=1 // loop_header
      %s21 = sphi 0, %s25
      %p22 = scmp.ge.s32.totalorder %s21, 6
      %s31 = sphi 0, %s33
      %s34 = sphi 0, %s31
      %s35 = sphi 0, %s34
      %s51 = sphi 0, %s35
      %s57 = sphi 0, %s59
      %s60 = sphi 0, %s57
      %s61 = sphi 0, %s60
      %s77 = sphi 0, %s61
      %s83 = sphi 0, %s85
      %s86 = sphi 0, %s83
      %s87 = sphi 0, %s86
      %s103 = sphi 0, %s87
      %s107 = sphi 0, %s107
      %s109 = sphi 0, %s107
      %s110 = sphi 0, %s109
      %s124 = sphi 0, %s110
    $region4: #{tpu_custom_call.1} parent=1 // loop_header_branch
      %24 = sbr.rel (%p22) target = $region8
    $region5: #{tpu_custom_call.1} parent=1 // loop_body
      %s26 = ssub.s32 %s21, 1
      %s27 = ssub.s32 %s21, 2
      %s28 = sadd.s32 %s21, 1
      %s29 = ssub.s32 %s21, %s28
      %p30 = scmp.eq.s32.totalorder %s29, 0
      %s32 = sadd.s32 %s31, 1
      %s33 = scalar_select %p30, %s31, %s32
      %p36 = pneg %p30
      %p37 = scmp.eq.s32.totalorder %s21, 3
      %p38 = por %p36, %p37
      %p39 = scmp.ne.s32.totalorder %s31, %s34
      %p40 = scmp.eq.s32.totalorder %s21, 0
      %p41 = por %p39, %p40
      %p42 = scmp.ne.s32.totalorder %s31, %s34
      %p43 = scmp.eq.s32.totalorder %s26, 3
      %p44 = por %p42, %p43
      %p45 = scmp.ne.s32.totalorder %s34, %s35
      %p46 = scmp.eq.s32.totalorder %s26, 0
      %p47 = por %p45, %p46
      %p48 = scmp.ne.s32.totalorder %s34, %s35
      %p49 = scmp.eq.s32.totalorder %s27, 3
      %p50 = por %p48, %p49
      %p52 = scmp.ne.s32.totalorder %s35, %s51
      %p53 = scmp.eq.s32.totalorder %s27, 0
      %p54 = por %p52, %p53
      %s55 = ssub.s32 %s21, %s28
      %p56 = scmp.eq.s32.totalorder %s55, 0
      %s58 = sadd.s32 %s57, 1
      %s59 = scalar_select %p56, %s57, %s58
      %p62 = pneg %p56
      %p63 = scmp.eq.s32.totalorder %s21, 3
      %p64 = por %p62, %p63
      %p65 = scmp.ne.s32.totalorder %s57, %s60
      %p66 = scmp.eq.s32.totalorder %s21, 0
      %p67 = por %p65, %p66
      %p68 = scmp.ne.s32.totalorder %s57, %s60
      %p69 = scmp.eq.s32.totalorder %s26, 3
      %p70 = por %p68, %p69
      %p71 = scmp.ne.s32.totalorder %s60, %s61
      %p72 = scmp.eq.s32.totalorder %s26, 0
      %p73 = por %p71, %p72
      %p74 = scmp.ne.s32.totalorder %s60, %s61
      %p75 = scmp.eq.s32.totalorder %s27, 3
      %p76 = por %p74, %p75
      %p78 = scmp.ne.s32.totalorder %s61, %s77
      %p79 = scmp.eq.s32.totalorder %s27, 0
      %p80 = por %p78, %p79
      %s81 = ssub.s32 %s21, %s28
      %p82 = scmp.eq.s32.totalorder %s81, 0
      %s84 = sadd.s32 %s83, 1
      %s85 = scalar_select %p82, %s83, %s84
      %p88 = pneg %p82
      %p89 = scmp.eq.s32.totalorder %s21, 3
      %p90 = por %p88, %p89
      %p91 = scmp.ne.s32.totalorder %s83, %s86
      %p92 = scmp.eq.s32.totalorder %s21, 0
      %p93 = por %p91, %p92
      %p94 = scmp.ne.s32.totalorder %s83, %s86
      %p95 = scmp.eq.s32.totalorder %s26, 3
      %p96 = por %p94, %p95
      %p97 = scmp.ne.s32.totalorder %s86, %s87
      %p98 = scmp.eq.s32.totalorder %s26, 0
      %p99 = por %p97, %p98
      %p100 = scmp.ne.s32.totalorder %s86, %s87
      %p101 = scmp.eq.s32.totalorder %s27, 3
      %p102 = por %p100, %p101
      %p104 = scmp.ne.s32.totalorder %s87, %s103
      %p105 = scmp.eq.s32.totalorder %s27, 0
      %p106 = por %p104, %p105
      %s108 = sadd.s32 %s107, 1
      %p111 = scmp.eq.s32.totalorder %s21, 3
      %p112 = scmp.ne.s32.totalorder %s107, %s109
      %p113 = scmp.eq.s32.totalorder %s21, 0
      %p114 = por %p112, %p113
      %p115 = scmp.ne.s32.totalorder %s107, %s109
      %p116 = scmp.eq.s32.totalorder %s26, 3
      %p117 = por %p115, %p116
      %p118 = scmp.ne.s32.totalorder %s109, %s110
      %p119 = scmp.eq.s32.totalorder %s26, 0
      %p120 = por %p118, %p119
      %p121 = scmp.ne.s32.totalorder %s109, %s110
      %p122 = scmp.eq.s32.totalorder %s27, 3
      %p123 = por %p121, %p122
      %p125 = scmp.ne.s32.totalorder %s110, %s124
      %p126 = scmp.eq.s32.totalorder %s27, 0
      %p127 = por %p125, %p126
      %p128 = scmp.le.s32.totalorder 1, %s21
      %p129 = scmp.lt.s32.totalorder %s21, 5
      %p130 = pnand %p128, %p129
      %p131 = pneg %p130
      // Predicated region
      $region9: #{tpu_custom_call.1} parent=5 // pred_check
        _
      $region10: #{tpu_custom_call.1} parent=5 // pred_check_branch
        %133 = sbr.rel (%p130) target = $region12
      $region11: #{tpu_custom_call.1} parent=5 // pred_region
        %s134 = ssub.s32 %s21, 1
      $region12: #{tpu_custom_call.1} parent=5 // pred_fallthru
        _
      %p135 = scmp.lt.s32.totalorder %s21, 4
      // Predicated region
      $region13: #{tpu_custom_call.1} parent=5 // pred_check
        %p136 = pneg %p135
      $region14: #{tpu_custom_call.1} parent=5 // pred_check_branch
        %138 = sbr.rel (%p136) target = $region16
      $region15: #{tpu_custom_call.1} parent=5 // pred_region
        // Predicated region
        $region17: #{tpu_custom_call.1} parent=15 // pred_check
          %p139 = pneg %p41
        $region18: #{tpu_custom_call.1} parent=15 // pred_check_branch
          %141 = sbr.rel (%p139) target = $region20
        $region19: #{tpu_custom_call.1} parent=15 // pred_region
          %s142 = sand.u32 %s31, 1
          %s143 = scalar_lea.sflag [#allocation6], %s142
          %s144 = sand.u32 %s31, 1
          %s145 = smul.addr %s144, 32
          %s146 = scalar_lea.vmem [#allocation5], %s145
          %s147 = smul.u32 2, %s21
          %s149 = ssub.s32 512, 512
          %150 = vsyncadd %s143, %s149
          %s151 = smul.addr %s147, 2
          %s152 = smul.addr %s151, 128
          %s153 = scalar_lea.hbm %s1, %s152
          %s154 = sshll.u32 %s146, 4
          %s155 = int_to_ptr.vmem [resolvable:$true] %s154
          %160 = dma.hbm_to_vmem [thread:$0]  %s153, 512, %s155, %s143, 256, 256, 16
        $region20: #{tpu_custom_call.1} parent=15 // pred_fallthru
          _
        // Predicated region
        $region21: #{tpu_custom_call.1} parent=15 // pred_check
          %p161 = pneg %p67
        $region22: #{tpu_custom_call.1} parent=15 // pred_check_branch
          %163 = sbr.rel (%p161) target = $region24
        $region23: #{tpu_custom_call.1} parent=15 // pred_region
          %s164 = sand.u32 %s21, 1
          %s165 = scalar_lea.sflag [#allocation9], %s164
          %s166 = sand.u32 %s57, 1
          %s167 = smul.addr %s166, 32
          %s168 = scalar_lea.vmem [#allocation8], %s167
          %s169 = smul.u32 2, %s21
          %s171 = ssub.s32 512, 512
          %172 = vsyncadd %s165, %s171
          %s173 = smul.addr %s169, 2
          %s174 = smul.addr %s173, 128
          %s175 = scalar_lea.hbm %s2, %s174
          %s176 = sshll.u32 %s168, 4
          %s177 = int_to_ptr.vmem [resolvable:$true] %s176
          %182 = dma.hbm_to_vmem [thread:$0]  %s175, 512, %s177, %s165, 256, 256, 16
        $region24: #{tpu_custom_call.1} parent=15 // pred_fallthru
          _
        // Predicated region
        $region25: #{tpu_custom_call.1} parent=15 // pred_check
          %p183 = pneg %p93
        $region26: #{tpu_custom_call.1} parent=15 // pred_check_branch
          %185 = sbr.rel (%p183) target = $region28
        $region27: #{tpu_custom_call.1} parent=15 // pred_region
          %s186 = sand.u32 %s21, 1
          %s187 = scalar_lea.sflag [#allocation9], %s186
          %s188 = sand.u32 %s83, 1
          %s189 = smul.addr %s188, 32
          %s190 = scalar_lea.vmem [#allocation10], %s189
          %s191 = smul.u32 2, %s21
          %s193 = ssub.s32 512, 512
          %194 = vsyncadd %s187, %s193
          %s195 = smul.addr %s191, 2
          %s196 = smul.addr %s195, 128
          %s197 = scalar_lea.hbm %s3, %s196
          %s198 = sshll.u32 %s190, 4
          %s199 = int_to_ptr.vmem [resolvable:$true] %s198
          %204 = dma.hbm_to_vmem [thread:$0]  %s197, 512, %s199, %s187, 256, 256, 16
        $region28: #{tpu_custom_call.1} parent=15 // pred_fallthru
          _
      $region16: #{tpu_custom_call.1} parent=5 // pred_fallthru
        _
      %p205 = scmp.le.s32.totalorder 1, %s21
      %p206 = scmp.lt.s32.totalorder %s21, 5
      %p207 = pnand %p205, %p206
      %p208 = pneg %p207
      // Predicated region
      $region29: #{tpu_custom_call.1} parent=5 // pred_check
        _
      $region30: #{tpu_custom_call.1} parent=5 // pred_check_branch
        %210 = sbr.rel (%p207) target = $region32
      $region31: #{tpu_custom_call.1} parent=5 // pred_region
        %s211 = ssub.s32 %s21, 1
        %s212 = sand.u32 %s34, 1
        %s213 = scalar_lea.sflag [#allocation6], %s212
        %s214 = sand.u32 %s34, 1
        %s215 = smul.addr %s214, 32
        %s216 = scalar_lea.vmem [#allocation5], %s215
        // Predicated region
        $region33: #{tpu_custom_call.1} parent=31 // pred_check
          %p217 = pneg %p47
        $region34: #{tpu_custom_call.1} parent=31 // pred_check_branch
          %219 = sbr.rel (%p217) target = $region36
        $region35: #{tpu_custom_call.1} parent=31 // pred_region
          %220 = dma.done %s213, 512
        $region36: #{tpu_custom_call.1} parent=31 // pred_fallthru
          _
        %s221 = sand.u32 %s26, 1
        %s222 = scalar_lea.sflag [#allocation9], %s221
        %s223 = sand.u32 %s60, 1
        %s224 = smul.addr %s223, 32
        %s225 = scalar_lea.vmem [#allocation8], %s224
        // Predicated region
        $region37: #{tpu_custom_call.1} parent=31 // pred_check
          %p226 = pneg %p73
        $region38: #{tpu_custom_call.1} parent=31 // pred_check_branch
          %228 = sbr.rel (%p226) target = $region40
        $region39: #{tpu_custom_call.1} parent=31 // pred_region
          %229 = dma.done %s222, 512
        $region40: #{tpu_custom_call.1} parent=31 // pred_fallthru
          _
        %s230 = sand.u32 %s26, 1
        %s231 = scalar_lea.sflag [#allocation9], %s230
        %s232 = sand.u32 %s86, 1
        %s233 = smul.addr %s232, 32
        %s234 = scalar_lea.vmem [#allocation10], %s233
        // Predicated region
        $region41: #{tpu_custom_call.1} parent=31 // pred_check
          %p235 = pneg %p99
        $region42: #{tpu_custom_call.1} parent=31 // pred_check_branch
          %237 = sbr.rel (%p235) target = $region44
        $region43: #{tpu_custom_call.1} parent=31 // pred_region
          %238 = dma.done %s231, 512
        $region44: #{tpu_custom_call.1} parent=31 // pred_fallthru
          _
        %s239 = sand.u32 %s34, 1
        %s240 = scalar_lea.sflag [#allocation6], %s239
        %s241 = sand.u32 %s34, 1
        %s242 = smul.addr %s241, 32
        %s243 = scalar_lea.vmem [#allocation5], %s242
        %p244 = pneg %p47
        %p245 = pneg %p44
        %s246 = sand.u32 %s26, 1
        %s247 = scalar_lea.sflag [#allocation9], %s246
        %s248 = sand.u32 %s60, 1
        %s249 = smul.addr %s248, 32
        %s250 = scalar_lea.vmem [#allocation8], %s249
        %p251 = pneg %p73
        %p252 = pneg %p70
        %s253 = sand.u32 %s26, 1
        %s254 = scalar_lea.sflag [#allocation9], %s253
        %s255 = sand.u32 %s86, 1
        %s256 = smul.addr %s255, 32
        %s257 = scalar_lea.vmem [#allocation10], %s256
        %p258 = pneg %p99
        %p259 = pneg %p96
        %p260 = pneg %p120
        %p261 = pneg %p117
        %s262 = smul.u32 2, %s26
        %s263 = smul.u32 2, %s26
        %s264 = smul.u32 2, %s26
        %p265 = scmp.eq.s32.totalorder %s26, 0
        // Predicated region
        $region45: #{tpu_custom_call.1} parent=31 // pred_check
          %p266 = pneg %p265
        $region46: #{tpu_custom_call.1} parent=31 // pred_check_branch
          %268 = sbr.rel (%p266) target = $region48
        $region47: #{tpu_custom_call.1} parent=31 // pred_region
          %v269 = vlaneseq
          %vm270 = vcmp.ge.s32.totalorder %v269, 0
          %vm271 = vcmp.lt.s32.totalorder %v269, 256
          %vm272 = vmand %vm270, %vm271
          %273 = vst.msk [vmem:[#allocation2] sm:$0x3] %vm272, 0.0
        $region48: #{tpu_custom_call.1} parent=31 // pred_fallthru
          _
        %v274 = vld [vmem:[%s216] sm:$0xff]
        %v275 = vld [vmem:[%s216 + $0x8] sm:$0xff]
        %v276 = vld [vmem:[%s216 + $0x10] sm:$0xff]
        %v277 = vld [vmem:[%s216 + $0x18] sm:$0xff]
        %v278 = vld [vmem:[%s225] sm:$0xff]
        %v279 = vld [vmem:[%s225 + $0x8] sm:$0xff]
        %v280 = vld [vmem:[%s225 + $0x10] sm:$0xff]
        %v281 = vld [vmem:[%s225 + $0x18] sm:$0xff]
        %v282 = vld [vmem:[%s234] sm:$0xff]
        %v283 = vld [vmem:[%s234 + $0x8] sm:$0xff]
        %v284 = vld [vmem:[%s234 + $0x10] sm:$0xff]
        %v285 = vld [vmem:[%s234 + $0x18] sm:$0xff]
        %v286 = vlog2.pop %v274
        %v287 = vmul.f32 %v286, 0.6931472
        %v288 = vlog2.pop %v275
        %v289 = vmul.f32 %v288, 0.6931472
        %v290 = vlog2.pop %v276
        %v291 = vmul.f32 %v290, 0.6931472
        %v292 = vlog2.pop %v277
        %v293 = vmul.f32 %v292, 0.6931472
        %v294 = vmax.f32 %v287, -100.0
        %v295 = vmax.f32 %v289, -100.0
        %v296 = vmax.f32 %v291, -100.0
        %v297 = vmax.f32 %v293, -100.0
        %v298 = vsub.f32 1.0, %v274
        %v299 = vsub.f32 1.0, %v275
        %v300 = vsub.f32 1.0, %v276
        %v301 = vsub.f32 1.0, %v277
        %v302 = vlog2.pop %v298
        %v303 = vmul.f32 %v302, 0.6931472
        %v304 = vlog2.pop %v299
        %v305 = vmul.f32 %v304, 0.6931472
        %v306 = vlog2.pop %v300
        %v307 = vmul.f32 %v306, 0.6931472
        %v308 = vlog2.pop %v301
        %v309 = vmul.f32 %v308, 0.6931472
        %v310 = vmax.f32 %v303, -100.0
        %v311 = vmax.f32 %v305, -100.0
        %v312 = vmax.f32 %v307, -100.0
        %v313 = vmax.f32 %v309, -100.0
        %v314 = vsub.f32 0.0, %v282
        %v315 = vsub.f32 0.0, %v283
        %v316 = vsub.f32 0.0, %v284
        %v317 = vsub.f32 0.0, %v285
        %v318 = vmul.f32 %v278, %v294
        %v319 = vmul.f32 %v279, %v295
        %v320 = vmul.f32 %v280, %v296
        %v321 = vmul.f32 %v281, %v297
        %v322 = vsub.f32 1.0, %v278
        %v323 = vsub.f32 1.0, %v279
        %v324 = vsub.f32 1.0, %v280
        %v325 = vsub.f32 1.0, %v281
        %v326 = vmul.f32 %v322, %v310
        %v327 = vmul.f32 %v323, %v311
        %v328 = vmul.f32 %v324, %v312
        %v329 = vmul.f32 %v325, %v313
        %v330 = vadd.f32 %v318, %v326
        %v331 = vadd.f32 %v319, %v327
        %v332 = vadd.f32 %v320, %v328
        %v333 = vadd.f32 %v321, %v329
        %v334 = vmul.f32 %v314, %v330
        %v335 = vmul.f32 %v315, %v331
        %v336 = vmul.f32 %v316, %v332
        %v337 = vmul.f32 %v317, %v333
        %v338 = vld [vmem:[#allocation2] sm:$0x3]
        %v339 = vadd.f32 %v334, %v336
        %v340 = vrot.slane %v339, 4
        %v341 = vadd.f32 %v339, %v340
        %v342 = vrot.slane %v341, 2
        %v343 = vadd.f32 %v341, %v342
        %v344 = vrot.slane %v343, 1
        %v345 = vadd.f32 %v343, %v344
        %v346 = vadd.f32 %v335, %v337
        %v347 = vrot.slane %v346, 4
        %v348 = vadd.f32 %v346, %v347
        %v349 = vrot.slane %v348, 2
        %v350 = vadd.f32 %v348, %v349
        %v351 = vrot.slane %v350, 1
        %v352 = vadd.f32 %v350, %v351
        %v355 = vcombine.low %v345, %v352
        %v357 = vunpack.c.l.s4 1966171168
        %v358 = vunpack.c.0.s8 %v357
        %v359 = vlaneseq
        %v360 = vshrl.u32 %v359, 7
        %v361 = vsub.s32 %v358, %v360
        %v362 = vrot.slane %v355, %v361
        %v364 = vunpack.c.l.s4 1966171168
        %v365 = vunpack.c.0.s8 %v364
        %v366 = vlaneseq
        %v367 = vshrl.u32 %v366, 7
        %v368 = vsub.s32 %v365, %v367
        %v369 = vrot.slane %v362, %v368
        %v371 = vadd.f32 %v338, %v369
        %v372 = vlaneseq
        %vm373 = vcmp.ge.s32.totalorder %v372, 0
        %vm374 = vcmp.lt.s32.totalorder %v372, 256
        %vm375 = vmand %vm373, %vm374
        %376 = vst.msk [vmem:[#allocation2] sm:$0x3] %vm375, %v371
        %p377 = scmp.eq.s32.totalorder %s26, 3
        // Predicated region
        $region49: #{tpu_custom_call.1} parent=31 // pred_check
          %p378 = pneg %p377
        $region50: #{tpu_custom_call.1} parent=31 // pred_check_branch
          %380 = sbr.rel (%p378) target = $region52
        $region51: #{tpu_custom_call.1} parent=31 // pred_region
          %v381 = vld [vmem:[#allocation2] sm:$0x3]
          %v383 = vlaneseq
          %v384 = vshrl.u32 %v383, 7
          %v385 = vsub.s32 0, %v384
          %v386 = vrot.slane %v381, %v385
          %v387 = vlaneseq
          %v388 = vshrl.u32 %v387, 7
          %v389 = vsub.s32 1, %v388
          %v390 = vrot.slane %v381, %v389
          %vm393 = vcmask 1040384
          %v394 = vsel %vm393, %v386, 0.0
          %v395 = vsel %vm393, %v390, 0.0
          %v396 = vadd.f32 %v394, %v395
          %397 = vadd.xlane.f32.xlu0 %v396
          %v398 = vpop.xlane.xlu0 %397
          %v399 = vrot.slane %v398, 4
          %v400 = vadd.f32 %v398, %v399
          %v401 = vrot.slane %v400, 2
          %v402 = vadd.f32 %v400, %v401
          %v403 = vrot.slane %v402, 1
          %v404 = vadd.f32 %v402, %v403
          %s405 = vtos %v404
          %s406 = smul.f32 %s405, 6.1035156e-05
          %s407 = sld [smem:[#allocation4]]
          %s408 = sld [smem:[#allocation4 + $0x1]]
          %s409 = ssub.f32 %s407, %s408
          %s410 = sand.u32 2147483647, %s409
          %p411 = scmp.lt.f32.partialorder %s410, 0.5
          %s412 = scalar_select %p411, 1.0, 0.0
          %s413 = sadd.f32 %s406, %s412
          %s414 = scalar_lea.smem [#allocation11], 0
          %415 = sst [smem:[%s414]] %s413
        $region52: #{tpu_custom_call.1} parent=31 // pred_fallthru
          _
        // Predicated region
        $region53: #{tpu_custom_call.1} parent=31 // pred_check
          %p416 = pneg %p117
        $region54: #{tpu_custom_call.1} parent=31 // pred_check_branch
          %418 = sbr.rel (%p416) target = $region56
        $region55: #{tpu_custom_call.1} parent=31 // pred_region
          %s420 = ssub.s32 16, 16
          %421 = vsyncadd [#allocation7], %s420
          %424 = dma.smem_to_hbm [#allocation11], 16, %s4, [#allocation7]
        $region56: #{tpu_custom_call.1} parent=31 // pred_fallthru
          _
        // Predicated region
        $region57: #{tpu_custom_call.1} parent=31 // pred_check
          %p425 = pneg %p117
        $region58: #{tpu_custom_call.1} parent=31 // pred_check_branch
          %427 = sbr.rel (%p425) target = $region60
        $region59: #{tpu_custom_call.1} parent=31 // pred_region
          %428 = dma.done [#allocation7], 16
        $region60: #{tpu_custom_call.1} parent=31 // pred_fallthru
          _
        %429 = sfence
      $region32: #{tpu_custom_call.1} parent=5 // pred_fallthru
        _
      %p430 = scmp.le.s32.totalorder 2, %s21
      // Predicated region
      $region61: #{tpu_custom_call.1} parent=5 // pred_check
        %p431 = pneg %p430
      $region62: #{tpu_custom_call.1} parent=5 // pred_check_branch
        %433 = sbr.rel (%p431) target = $region64
      $region63: #{tpu_custom_call.1} parent=5 // pred_region
        %s434 = ssub.s32 %s21, 2
      $region64: #{tpu_custom_call.1} parent=5 // pred_fallthru
        _
    $region6: #{tpu_custom_call.1} parent=1 // loop_footer
      %s25 = sadd.s32 1, %s21
    $region7: #{tpu_custom_call.1} parent=1 // loop_footer_branch
      %20 = sbr.rel target = $region3
    $region8: #{tpu_custom_call.1} parent=1 // loop_exit
      _
    %435 = vsyncpa [#allocation6], 1
    %s436 = scalar_lea.sflag [#allocation6], 1
    %437 = vsyncpa %s436, 1
    %438 = vsyncpa [#allocation9], 1
    %s439 = scalar_lea.sflag [#allocation9], 1
    %440 = vsyncpa %s439, 1
    %441 = vsyncpa [#allocation7], 1
    %s442 = scalar_lea.sflag [#allocation7], 1
    %443 = vsyncpa %s442, 1

</llo_original>
